<compile_context>
chip_gen: v5e
topology: v5e:2x2
jax: 0.10.0
libtpu: 0.0.40
codegen_flags: <defaults>
</compile_context>

<pallas_src>
import functools

import jax
import jax.numpy as jnp
from jax.experimental import pallas as pl
from jax.experimental.pallas import tpu as pltpu


def _round_up(x, m):
    return ((x + m - 1) // m) * m


def _mlp_gene_kernel(x_ref, w1_ref, b1_ref, w2_ref, b2_ref, w3_ref, b3_ref,
                     o_ref, xs_ref):
    k = x_ref.shape[1]        # native input-feature dim (e.g. 134)
    k_pad = xs_ref.shape[1]   # lane-aligned contraction dim (multiple of 128)

    # Stage x into a lane-aligned bf16 scratch (pure in-VMEM copy; no HBM pass).
    # Zero the pad lanes every step: with ("parallel",) semantics each TensorCore
    # owns its own scratch, so a "zero once at program_id==0" pattern is unsafe.
    if k_pad > k:
        xs_ref[:, k:k_pad] = jnp.zeros((xs_ref.shape[0], k_pad - k), jnp.bfloat16)
    xs_ref[:, 0:k] = x_ref[...].astype(jnp.bfloat16)

    # fc1 + ReLU  (bf16 operands, f32 MXU accumulation; bias/ReLU in f32)
    h1 = jnp.dot(xs_ref[...], w1_ref[...], preferred_element_type=jnp.float32)
    h1 = jnp.maximum(h1 + b1_ref[...], 0.0)
    # dropout1: identity at inference
    # fc2 + ReLU
    h2 = jnp.dot(h1.astype(jnp.bfloat16), w2_ref[...],
                 preferred_element_type=jnp.float32)
    h2 = jnp.maximum(h2 + b2_ref[...], 0.0)
    # dropout2: identity at inference
    # fc3 (no activation)
    out = jnp.dot(h2.astype(jnp.bfloat16), w3_ref[...],
                  preferred_element_type=jnp.float32)
    o_ref[...] = (out + b3_ref[...]).astype(o_ref.dtype)


@functools.partial(jax.jit, static_argnames=("block_b", "out_dtype"))
def mlp_gene_forward(x, params, *, block_b=1024, out_dtype=jnp.float32):
    """x: [B, input_size] float32.

    params weights are stored transposed vs PyTorch, i.e. [in_features, out_features],
    biases as [1, out_features], so the kernel computes y = x @ W + b on the MXU.
    Set out_dtype=jnp.bfloat16 if downstream consumers accept bf16 (halves the
    output writeback bytes in this mem-bound regime)."""
    w1, b1 = params["w1"], params["b1"]
    w2, b2 = params["w2"], params["b2"]
    w3, b3 = params["w3"], params["b3"]

    B, K = x.shape
    H1 = w1.shape[1]
    H2 = w2.shape[1]
    O = w3.shape[1]

    K_pad = _round_up(K, 128)

    # Batch tile: tiny batches use one tile; otherwise aim for >= 4 grid steps
    # (v7x megacore + pipelining) with a 256-row floor and block_b(=1024) cap.
    if B <= 256:
        TB = _round_up(max(B, 8), 8)
    else:
        TB = min(block_b, max(256, _round_up(pl.cdiv(B, 4), 256)))
    B_pad = _round_up(B, TB)

    # One-time pad/cast of the (tiny) weights only; x streams in its native layout.
    w1_p = jnp.pad(w1, ((0, K_pad - K), (0, 0))).astype(jnp.bfloat16)
    w2_b = w2.astype(jnp.bfloat16)
    w3_b = w3.astype(jnp.bfloat16)
    # Batch-dim pad only when B doesn't divide into TB tiles (no feature-dim pass).
    x_in = x if B_pad == B else jnp.pad(x, ((0, B_pad - B), (0, 0)))

    grid = (B_pad // TB,)
    const2d = lambda i: (0, 0)
    in_specs = [
        pl.BlockSpec((TB, K), lambda i: (i, 0)),   # x: streamed per batch tile, native K
        pl.BlockSpec((K_pad, H1), const2d),        # weights/biases: VMEM-resident
        pl.BlockSpec((1, H1), const2d),
        pl.BlockSpec((H1, H2), const2d),
        pl.BlockSpec((1, H2), const2d),
        pl.BlockSpec((H2, O), const2d),
        pl.BlockSpec((1, O), const2d),
    ]
    out_specs = pl.BlockSpec((TB, O), lambda i: (i, 0))

    flops = 2 * B_pad * (K_pad * H1 + H1 * H2 + H2 * O)
    bytes_accessed = (
        B_pad * K * x.dtype.itemsize                       # x read (native f32)
        + (w1_p.size + w2_b.size + w3_b.size) * 2          # bf16 weights
        + (b1.size + b2.size + b3.size) * 4                # f32 biases
        + B_pad * O * jnp.dtype(out_dtype).itemsize        # output writeback
    )

    out = pl.pallas_call(
        _mlp_gene_kernel,
        out_shape=jax.ShapeDtypeStruct((B_pad, O), out_dtype),
        grid=grid,
        in_specs=in_specs,
        out_specs=out_specs,
        scratch_shapes=[pltpu.VMEM((TB, K_pad), jnp.bfloat16)],
        compiler_params=pltpu.CompilerParams(
            dimension_semantics=("parallel",)),
        cost_estimate=pl.CostEstimate(
            flops=flops, transcendentals=0, bytes_accessed=bytes_accessed),
    )(x_in, w1_p, b1, w2_b, b2, w3_b, b3)
    return out[:B]


def init_params(key, input_size, hidden1_size=256, hidden2_size=128, output_size=128):
    """PyTorch nn.Linear-style init (uniform +/- 1/sqrt(fan_in)).

    Weights stored as [in_features, out_features]. fc_project / fc4 are unused in
    forward() and therefore omitted."""
    def linear(k, fan_in, fan_out):
        kw, kb = jax.random.split(k)
        bound = 1.0 / jnp.sqrt(fan_in)
        w = jax.random.uniform(kw, (fan_in, fan_out), jnp.float32, -bound, bound)
        b = jax.random.uniform(kb, (1, fan_out), jnp.float32, -bound, bound)
        return w, b

    k1, k2, k3 = jax.random.split(key, 3)
    w1, b1 = linear(k1, input_size, hidden1_size)
    w2, b2 = linear(k2, hidden1_size, hidden2_size)
    w3, b3 = linear(k3, hidden2_size, output_size)
    return {"w1": w1, "b1": b1, "w2": w2, "b2": b2, "w3": w3, "b3": b3}


def reference_forward(x, params):
    """Pure-JAX reference mirroring the kernel's dtypes (bf16 operands, f32 accum).
    NOTE: bf16 operands diverge slightly from PyTorch's all-f32 forward; flagged
    in case bit-level parity with the PyTorch module is ever required."""
    bf = jnp.bfloat16
    h1 = jnp.maximum(
        jnp.dot(x.astype(bf), params["w1"].astype(bf),
                preferred_element_type=jnp.float32) + params["b1"], 0.0)
    h2 = jnp.maximum(
        jnp.dot(h1.astype(bf), params["w2"].astype(bf),
                preferred_element_type=jnp.float32) + params["b2"], 0.0)
    return jnp.dot(h2.astype(bf), params["w3"].astype(bf),
                   preferred_element_type=jnp.float32) + params["b3"]


if __name__ == "__main__":
    input_size = 134      # gene-feature dim (lane-padded to 256 inside the kernel)
    hidden1, hidden2, out_size = 256, 128, 128
    batch = 16

    key = jax.random.PRNGKey(0)
    kx, kp = jax.random.split(key)
    x = jax.random.normal(kx, (batch, input_size), dtype=jnp.float32)
    params = init_params(kp, input_size, hidden1, hidden2, out_size)

    out = mlp_gene_forward(x, params)
    out = jax.block_until_ready(out)

    ref = reference_forward(x, params)
    assert out.shape == (batch, out_size), out.shape
    assert jnp.allclose(out, ref, atol=2e-3, rtol=2e-3), "mismatch vs JAX reference"

    print("KERNEL_OK")
</pallas_src>

<mosaic_0001>
module attributes {stable_mosaic.version = 11 : i64} {
  func.func @_mlp_gene_kernel(%arg0: i32, %arg1: memref<16x134xf32, #tpu.memory_space<vmem>>, %arg2: memref<256x256xbf16, #tpu.memory_space<vmem>>, %arg3: memref<1x256xf32, #tpu.memory_space<vmem>>, %arg4: memref<256x128xbf16, #tpu.memory_space<vmem>>, %arg5: memref<1x128xf32, #tpu.memory_space<vmem>>, %arg6: memref<128x128xbf16, #tpu.memory_space<vmem>>, %arg7: memref<1x128xf32, #tpu.memory_space<vmem>>, %arg8: memref<16x128xf32, #tpu.memory_space<vmem>>, %arg9: memref<16x256xbf16, #tpu.memory_space<vmem>>) attributes {dimension_semantics = [#tpu.dimension_semantics<parallel>], iteration_bounds = array<i64: 1>, scalar_prefetch = 0 : i64, scratch_operands = 1 : i64, tpu.core_type = #tpu.core_type<tc>, window_params = [{transform_indices = @transform_0, window_bounds = array<i64: 16, 134>}, {pipeline_mode = #tpu.pipeline_mode<synchronous>, transform_indices = @transform_1, window_bounds = array<i64: 256, 256>}, {pipeline_mode = #tpu.pipeline_mode<synchronous>, transform_indices = @transform_2, window_bounds = array<i64: 1, 256>}, {pipeline_mode = #tpu.pipeline_mode<synchronous>, transform_indices = @transform_3, window_bounds = array<i64: 256, 128>}, {pipeline_mode = #tpu.pipeline_mode<synchronous>, transform_indices = @transform_4, window_bounds = array<i64: 1, 128>}, {pipeline_mode = #tpu.pipeline_mode<synchronous>, transform_indices = @transform_5, window_bounds = array<i64: 128, 128>}, {pipeline_mode = #tpu.pipeline_mode<synchronous>, transform_indices = @transform_6, window_bounds = array<i64: 1, 128>}, {transform_indices = @transform_7, window_bounds = array<i64: 16, 128>}]} {
    %cst = arith.constant 0.000000e+00 : bf16
    %0 = vector.broadcast %cst : bf16 to vector<16x122xbf16>
    %c0 = arith.constant 0 : index
    %c134 = arith.constant 134 : index
    %1 = vector.load %arg9[%c0, %c134] : memref<16x256xbf16, #tpu.memory_space<vmem>>, vector<16x122xbf16>
    tpu.vector_store %arg9[%c0, %c134], %0 {strides = array<i32>} : memref<16x256xbf16, #tpu.memory_space<vmem>>, vector<16x122xbf16>,
    %c0_0 = arith.constant 0 : index
    %c0_1 = arith.constant 0 : index
    %2 = vector.load %arg1[%c0_0, %c0_1] : memref<16x134xf32, #tpu.memory_space<vmem>>, vector<16x134xf32>
    %3 = arith.truncf %2 : vector<16x134xf32> to vector<16x134xbf16>
    %c0_2 = arith.constant 0 : index
    %c0_3 = arith.constant 0 : index
    %4 = vector.load %arg9[%c0_2, %c0_3] : memref<16x256xbf16, #tpu.memory_space<vmem>>, vector<16x134xbf16>
    tpu.vector_store %arg9[%c0_2, %c0_3], %3 {strides = array<i32>} : memref<16x256xbf16, #tpu.memory_space<vmem>>, vector<16x134xbf16>,
    %c0_4 = arith.constant 0 : index
    %c0_5 = arith.constant 0 : index
    %5 = vector.load %arg9[%c0_4, %c0_5] : memref<16x256xbf16, #tpu.memory_space<vmem>>, vector<16x256xbf16>
    %c0_6 = arith.constant 0 : index
    %c0_7 = arith.constant 0 : index
    %6 = vector.load %arg2[%c0_6, %c0_7] : memref<256x256xbf16, #tpu.memory_space<vmem>>, vector<256x256xbf16>
    %cst_8 = arith.constant dense<0.000000e+00> : vector<16x256xf32>
    %7 = tpu.matmul %5, %6, %cst_8 {dimension_numbers = #tpu.dot_dimension_numbers<[1], [0], [0], [1], [0, 0, 1, 1], [], []>} : vector<16x256xbf16>, vector<256x256xbf16>, vector<16x256xf32> -> vector<16x256xf32>
    %c0_9 = arith.constant 0 : index
    %c0_10 = arith.constant 0 : index
    %8 = vector.load %arg3[%c0_9, %c0_10] : memref<1x256xf32, #tpu.memory_space<vmem>>, vector<1x256xf32>
    %9 = vector.broadcast %8 : vector<1x256xf32> to vector<16x256xf32>
    %10 = arith.addf %7, %9 : vector<16x256xf32>
    %cst_11 = arith.constant 0.000000e+00 : f32
    %11 = vector.broadcast %cst_11 : f32 to vector<16x256xf32>
    %12 = arith.maximumf %10, %11 : vector<16x256xf32>
    %13 = arith.truncf %12 : vector<16x256xf32> to vector<16x256xbf16>
    %c0_12 = arith.constant 0 : index
    %c0_13 = arith.constant 0 : index
    %14 = vector.load %arg4[%c0_12, %c0_13] : memref<256x128xbf16, #tpu.memory_space<vmem>>, vector<256x128xbf16>
    %cst_14 = arith.constant dense<0.000000e+00> : vector<16x128xf32>
    %15 = tpu.matmul %13, %14, %cst_14 {dimension_numbers = #tpu.dot_dimension_numbers<[1], [0], [0], [1], [0, 0, 1, 1], [], []>} : vector<16x256xbf16>, vector<256x128xbf16>, vector<16x128xf32> -> vector<16x128xf32>
    %c0_15 = arith.constant 0 : index
    %c0_16 = arith.constant 0 : index
    %16 = vector.load %arg5[%c0_15, %c0_16] : memref<1x128xf32, #tpu.memory_space<vmem>>, vector<1x128xf32>
    %17 = vector.broadcast %16 : vector<1x128xf32> to vector<16x128xf32>
    %18 = arith.addf %15, %17 : vector<16x128xf32>
    %cst_17 = arith.constant 0.000000e+00 : f32
    %19 = vector.broadcast %cst_17 : f32 to vector<16x128xf32>
    %20 = arith.maximumf %18, %19 : vector<16x128xf32>
    %21 = arith.truncf %20 : vector<16x128xf32> to vector<16x128xbf16>
    %c0_18 = arith.constant 0 : index
    %c0_19 = arith.constant 0 : index
    %22 = vector.load %arg6[%c0_18, %c0_19] : memref<128x128xbf16, #tpu.memory_space<vmem>>, vector<128x128xbf16>
    %cst_20 = arith.constant dense<0.000000e+00> : vector<16x128xf32>
    %23 = tpu.matmul %21, %22, %cst_20 {dimension_numbers = #tpu.dot_dimension_numbers<[1], [0], [0], [1], [0, 0, 1, 1], [], []>} : vector<16x128xbf16>, vector<128x128xbf16>, vector<16x128xf32> -> vector<16x128xf32>
    %c0_21 = arith.constant 0 : index
    %c0_22 = arith.constant 0 : index
    %24 = vector.load %arg7[%c0_21, %c0_22] : memref<1x128xf32, #tpu.memory_space<vmem>>, vector<1x128xf32>
    %25 = vector.broadcast %24 : vector<1x128xf32> to vector<16x128xf32>
    %26 = arith.addf %23, %25 : vector<16x128xf32>
    %c0_23 = arith.constant 0 : index
    %c0_24 = arith.constant 0 : index
    %27 = vector.load %arg8[%c0_23, %c0_24] : memref<16x128xf32, #tpu.memory_space<vmem>>, vector<16x128xf32>
    tpu.vector_store %arg8[%c0_23, %c0_24], %26 {strides = array<i32>} : memref<16x128xf32, #tpu.memory_space<vmem>>, vector<16x128xf32>,
    return
  }
  func.func @transform_0(%arg0: i32) -> (i32, i32) {
    %c0_i32 = arith.constant 0 : i32
    %c0_i32_0 = arith.constant 0 : i32
    return %arg0, %c0_i32 : i32, i32
  }
  func.func @transform_1(%arg0: i32) -> (i32, i32) {
    %c0_i32 = arith.constant 0 : i32
    %c0_i32_0 = arith.constant 0 : i32
    %c0_i32_1 = arith.constant 0 : i32
    return %c0_i32, %c0_i32_0 : i32, i32
  }
  func.func @transform_2(%arg0: i32) -> (i32, i32) {
    %c0_i32 = arith.constant 0 : i32
    %c0_i32_0 = arith.constant 0 : i32
    %c0_i32_1 = arith.constant 0 : i32
    return %c0_i32, %c0_i32_0 : i32, i32
  }
  func.func @transform_3(%arg0: i32) -> (i32, i32) {
    %c0_i32 = arith.constant 0 : i32
    %c0_i32_0 = arith.constant 0 : i32
    %c0_i32_1 = arith.constant 0 : i32
    return %c0_i32, %c0_i32_0 : i32, i32
  }
  func.func @transform_4(%arg0: i32) -> (i32, i32) {
    %c0_i32 = arith.constant 0 : i32
    %c0_i32_0 = arith.constant 0 : i32
    %c0_i32_1 = arith.constant 0 : i32
    return %c0_i32, %c0_i32_0 : i32, i32
  }
  func.func @transform_5(%arg0: i32) -> (i32, i32) {
    %c0_i32 = arith.constant 0 : i32
    %c0_i32_0 = arith.constant 0 : i32
    %c0_i32_1 = arith.constant 0 : i32
    return %c0_i32, %c0_i32_0 : i32, i32
  }
  func.func @transform_6(%arg0: i32) -> (i32, i32) {
    %c0_i32 = arith.constant 0 : i32
    %c0_i32_0 = arith.constant 0 : i32
    %c0_i32_1 = arith.constant 0 : i32
    return %c0_i32, %c0_i32_0 : i32, i32
  }
  func.func @transform_7(%arg0: i32) -> (i32, i32) {
    %c0_i32 = arith.constant 0 : i32
    %c0_i32_0 = arith.constant 0 : i32
    return %arg0, %c0_i32 : i32, i32
  }
}

</mosaic_0001>

<llo_original>
// kernel: mlp_gene_forward.1
$region0: #{mlp_gene_forward.1}
  #allocation0 [shape = 'u32[]', space=smem, size = 0x4, offset = 0x4, fixed_abs, tag = 'smem constant byte address 0x4 - core index']
  #allocation1 [shape = 'u32[72,128]{1,0:T(1,128)}', space=vmem, size = 0x9000, scoped, tag = 'internal scratch']
  #allocation2 [shape = 'bf16[16,256]{1,0:T(8,128)(2,1)}', space=vmem, size = 0x2000, scoped, tag = 'scratch operand']
  %s0 = inlined_call_operand.vmem [shape: f32[16,134], index: 0, kind: input, shape index: {}]
  %s1 = inlined_call_operand.vmem [shape: bf16[256,256], index: 1, kind: input, shape index: {}]
  %s2 = inlined_call_operand.vmem [shape: f32[1,256], index: 2, kind: input, shape index: {}]
  %s3 = inlined_call_operand.vmem [shape: bf16[256,128], index: 3, kind: input, shape index: {}]
  %s4 = inlined_call_operand.vmem [shape: f32[1,128], index: 4, kind: input, shape index: {}]
  %s5 = inlined_call_operand.vmem [shape: bf16[128,128], index: 5, kind: input, shape index: {}]
  %s6 = inlined_call_operand.vmem [shape: f32[1,128], index: 6, kind: input, shape index: {}]
  %s7 = inlined_call_operand.hbm [shape: f32[16,128], index: 7, kind: output, shape index: {}]
  %s8 = sld [smem:[#allocation0]]
  $region38: #{mlp_gene_forward.1} parent=0
    _
  %s10 = ssub.s32 1, %s8
  %s11 = scalar_select 0, %s10, %s8
  $region1: #{mlp_gene_forward.1} parent=0
    #allocation3 [shape = 'u8[8192]{0}', space=vmem, size = 0x2000, scoped, tag = 'output window, operand 0, single buffered']
    #allocation4 [shape = 's32[1]{0}', space=sflag, size = 0x4, scoped, tag = 'scoped memory for mlp_gene_forward.1']
    %12 = vsyncpa [#allocation4], 0
    // Predicated region
    $region2: #{mlp_gene_forward.1} parent=1 // pred_check
      _
    $region3: #{mlp_gene_forward.1} parent=1 // pred_check_branch
      %14 = sbr.rel (0) target = $region5
    $region4: #{mlp_gene_forward.1} parent=1 // pred_region
      _
    $region5: #{mlp_gene_forward.1} parent=1 // pred_fallthru
      _
    // Predicated region
    $region6: #{mlp_gene_forward.1} parent=1 // pred_check
      _
    $region7: #{mlp_gene_forward.1} parent=1 // pred_check_branch
      %16 = sbr.rel (0) target = $region9
    $region8: #{mlp_gene_forward.1} parent=1 // pred_region
      _
    $region9: #{mlp_gene_forward.1} parent=1 // pred_fallthru
      _
    // Predicated region
    $region10: #{mlp_gene_forward.1} parent=1 // pred_check
      _
    $region11: #{mlp_gene_forward.1} parent=1 // pred_check_branch
      %18 = sbr.rel (0) target = $region13
    $region12: #{mlp_gene_forward.1} parent=1 // pred_region
      _
    $region13: #{mlp_gene_forward.1} parent=1 // pred_fallthru
      _
    // Predicated region
    $region14: #{mlp_gene_forward.1} parent=1 // pred_check
      _
    $region15: #{mlp_gene_forward.1} parent=1 // pred_check_branch
      %20 = sbr.rel (0) target = $region17
    $region16: #{mlp_gene_forward.1} parent=1 // pred_region
      _
    $region17: #{mlp_gene_forward.1} parent=1 // pred_fallthru
      _
    // Predicated region
    $region18: #{mlp_gene_forward.1} parent=1 // pred_check
      _
    $region19: #{mlp_gene_forward.1} parent=1 // pred_check_branch
      %22 = sbr.rel (0) target = $region21
    $region20: #{mlp_gene_forward.1} parent=1 // pred_region
      _
    $region21: #{mlp_gene_forward.1} parent=1 // pred_fallthru
      _
    // Predicated region
    $region22: #{mlp_gene_forward.1} parent=1 // pred_check
      _
    $region23: #{mlp_gene_forward.1} parent=1 // pred_check_branch
      %24 = sbr.rel (0) target = $region25
    $region24: #{mlp_gene_forward.1} parent=1 // pred_region
      _
    $region25: #{mlp_gene_forward.1} parent=1 // pred_fallthru
      _
    // Predicated region
    $region26: #{mlp_gene_forward.1} parent=1 // pred_check
      _
    $region27: #{mlp_gene_forward.1} parent=1 // pred_check_branch
      %26 = sbr.rel (0) target = $region29
    $region28: #{mlp_gene_forward.1} parent=1 // pred_region
      _
    $region29: #{mlp_gene_forward.1} parent=1 // pred_fallthru
      _
    %vm28 = vcmask 1043504
    %29 = vst.msk [vmem:[#allocation2 + $0x4] sm:$0xf] %vm28, 0
    %30 = vst.msk [vmem:[#allocation2 + $0xc] sm:$0xf] %vm28, 0
    %v31 = vld [vmem:[%s0] sm:$0xff]
    %v32 = vld [vmem:[%s0 + $0x8] sm:$0xff]
    %v33 = vld [vmem:[%s0 + $0x10] sm:$0xff]
    %v34 = vld [vmem:[%s0 + $0x18] sm:$0xff]
    %v35 = vpack.c.bf16 %v32, %v31
    %v36 = vpack.c.bf16 %v34, %v33
    %vm37 = vcmask 1043456
    %vm38 = vcmask 48132
    %vm39 = vmor %vm38, %vm37
    %40 = vst.msk [vmem:[#allocation2] sm:$0xff] %vm39, %v35
    %41 = vst.msk [vmem:[#allocation2 + $0x8] sm:$0xff] %vm39, %v36
    %v42 = vld [vmem:[#allocation2] sm:$0xff]
    %v43 = vld [vmem:[#allocation2 + $0x8] sm:$0xff]
    %v44 = vld [vmem:[%s1] sm:$0xff]
    %v45 = vld [vmem:[%s1 + $0x8] sm:$0xff]
    %v46 = vld [vmem:[%s1 + $0x10] sm:$0xff]
    %v47 = vld [vmem:[%s1 + $0x18] sm:$0xff]
    %v48 = vld [vmem:[%s1 + $0x20] sm:$0xff]
    %v49 = vld [vmem:[%s1 + $0x28] sm:$0xff]
    %v50 = vld [vmem:[%s1 + $0x30] sm:$0xff]
    %v51 = vld [vmem:[%s1 + $0x38] sm:$0xff]
    %v52 = vld [vmem:[%s1 + $0x40] sm:$0xff]
    %v53 = vld [vmem:[%s1 + $0x48] sm:$0xff]
    %v54 = vld [vmem:[%s1 + $0x50] sm:$0xff]
    %v55 = vld [vmem:[%s1 + $0x58] sm:$0xff]
    %v56 = vld [vmem:[%s1 + $0x60] sm:$0xff]
    %v57 = vld [vmem:[%s1 + $0x68] sm:$0xff]
    %v58 = vld [vmem:[%s1 + $0x70] sm:$0xff]
    %v59 = vld [vmem:[%s1 + $0x78] sm:$0xff]
    %v60 = vld [vmem:[%s1 + $0x80] sm:$0xff]
    %v61 = vld [vmem:[%s1 + $0x88] sm:$0xff]
    %v62 = vld [vmem:[%s1 + $0x90] sm:$0xff]
    %v63 = vld [vmem:[%s1 + $0x98] sm:$0xff]
    %v64 = vld [vmem:[%s1 + $0xa0] sm:$0xff]
    %v65 = vld [vmem:[%s1 + $0xa8] sm:$0xff]
    %v66 = vld [vmem:[%s1 + $0xb0] sm:$0xff]
    %v67 = vld [vmem:[%s1 + $0xb8] sm:$0xff]
    %v68 = vld [vmem:[%s1 + $0xc0] sm:$0xff]
    %v69 = vld [vmem:[%s1 + $0xc8] sm:$0xff]
    %v70 = vld [vmem:[%s1 + $0xd0] sm:$0xff]
    %v71 = vld [vmem:[%s1 + $0xd8] sm:$0xff]
    %v72 = vld [vmem:[%s1 + $0xe0] sm:$0xff]
    %v73 = vld [vmem:[%s1 + $0xe8] sm:$0xff]
    %v74 = vld [vmem:[%s1 + $0xf0] sm:$0xff]
    %v75 = vld [vmem:[%s1 + $0xf8] sm:$0xff]
    %v76 = vld [vmem:[%s2] sm:$0x3]
    %v78 = vperm.slane %v76, 0
    %v79 = vperm.slane %v76, 1
    %v84 = vunpack.c.l.b16 %v42
    %v85 = vunpack.c.h.b16 %v42
    %v86 = vunpack.c.l.b16 %v43
    %v87 = vunpack.c.h.b16 %v43
    %v88 = vpack.c.b16 %v86, %v84
    %v89 = vpack.c.b16 %v87, %v85
    %v124 = vunpack.c.l.b16 %v44
    %v125 = vunpack.c.h.b16 %v44
    %v126 = vunpack.c.l.b16 %v45
    %v127 = vunpack.c.h.b16 %v45
    %v128 = vunpack.c.l.b16 %v46
    %v129 = vunpack.c.h.b16 %v46
    %v130 = vunpack.c.l.b16 %v47
    %v131 = vunpack.c.h.b16 %v47
    %v132 = vunpack.c.l.b16 %v48
    %v133 = vunpack.c.h.b16 %v48
    %v134 = vunpack.c.l.b16 %v49
    %v135 = vunpack.c.h.b16 %v49
    %v136 = vunpack.c.l.b16 %v50
    %v137 = vunpack.c.h.b16 %v50
    %v138 = vunpack.c.l.b16 %v51
    %v139 = vunpack.c.h.b16 %v51
    %v140 = vunpack.c.l.b16 %v52
    %v141 = vunpack.c.h.b16 %v52
    %v142 = vunpack.c.l.b16 %v53
    %v143 = vunpack.c.h.b16 %v53
    %v144 = vunpack.c.l.b16 %v54
    %v145 = vunpack.c.h.b16 %v54
    %v146 = vunpack.c.l.b16 %v55
    %v147 = vunpack.c.h.b16 %v55
    %v148 = vunpack.c.l.b16 %v56
    %v149 = vunpack.c.h.b16 %v56
    %v150 = vunpack.c.l.b16 %v57
    %v151 = vunpack.c.h.b16 %v57
    %v152 = vunpack.c.l.b16 %v58
    %v153 = vunpack.c.h.b16 %v58
    %v154 = vunpack.c.l.b16 %v59
    %v155 = vunpack.c.h.b16 %v59
    %v156 = vunpack.c.l.b16 %v60
    %v157 = vunpack.c.h.b16 %v60
    %v158 = vunpack.c.l.b16 %v61
    %v159 = vunpack.c.h.b16 %v61
    %v160 = vunpack.c.l.b16 %v62
    %v161 = vunpack.c.h.b16 %v62
    %v162 = vunpack.c.l.b16 %v63
    %v163 = vunpack.c.h.b16 %v63
    %v164 = vunpack.c.l.b16 %v64
    %v165 = vunpack.c.h.b16 %v64
    %v166 = vunpack.c.l.b16 %v65
    %v167 = vunpack.c.h.b16 %v65
    %v168 = vunpack.c.l.b16 %v66
    %v169 = vunpack.c.h.b16 %v66
    %v170 = vunpack.c.l.b16 %v67
    %v171 = vunpack.c.h.b16 %v67
    %v172 = vunpack.c.l.b16 %v68
    %v173 = vunpack.c.h.b16 %v68
    %v174 = vunpack.c.l.b16 %v69
    %v175 = vunpack.c.h.b16 %v69
    %v176 = vunpack.c.l.b16 %v70
    %v177 = vunpack.c.h.b16 %v70
    %v178 = vunpack.c.l.b16 %v71
    %v179 = vunpack.c.h.b16 %v71
    %v180 = vunpack.c.l.b16 %v72
    %v181 = vunpack.c.h.b16 %v72
    %v182 = vunpack.c.l.b16 %v73
    %v183 = vunpack.c.h.b16 %v73
    %v184 = vunpack.c.l.b16 %v74
    %v185 = vunpack.c.h.b16 %v74
    %v186 = vunpack.c.l.b16 %v75
    %v187 = vunpack.c.h.b16 %v75
    %v188 = vpack.c.b16 %v126, %v124
    %v189 = vpack.c.b16 %v127, %v125
    %v190 = vpack.c.b16 %v130, %v128
    %v191 = vpack.c.b16 %v131, %v129
    %v192 = vpack.c.b16 %v134, %v132
    %v193 = vpack.c.b16 %v135, %v133
    %v194 = vpack.c.b16 %v138, %v136
    %v195 = vpack.c.b16 %v139, %v137
    %v196 = vpack.c.b16 %v142, %v140
    %v197 = vpack.c.b16 %v143, %v141
    %v198 = vpack.c.b16 %v146, %v144
    %v199 = vpack.c.b16 %v147, %v145
    %v200 = vpack.c.b16 %v150, %v148
    %v201 = vpack.c.b16 %v151, %v149
    %v202 = vpack.c.b16 %v154, %v152
    %v203 = vpack.c.b16 %v155, %v153
    %v204 = vpack.c.b16 %v158, %v156
    %v205 = vpack.c.b16 %v159, %v157
    %v206 = vpack.c.b16 %v162, %v160
    %v207 = vpack.c.b16 %v163, %v161
    %v208 = vpack.c.b16 %v166, %v164
    %v209 = vpack.c.b16 %v167, %v165
    %v210 = vpack.c.b16 %v170, %v168
    %v211 = vpack.c.b16 %v171, %v169
    %v212 = vpack.c.b16 %v174, %v172
    %v213 = vpack.c.b16 %v175, %v173
    %v214 = vpack.c.b16 %v178, %v176
    %v215 = vpack.c.b16 %v179, %v177
    %v216 = vpack.c.b16 %v182, %v180
    %v217 = vpack.c.b16 %v183, %v181
    %v218 = vpack.c.b16 %v186, %v184
    %v219 = vpack.c.b16 %v187, %v185
    %252 = vmatpush.bf16.msra.mxu0 %v202
    %253 = vmatpush.bf16.msra.mxu0 %v200
    %254 = vmatpush.bf16.msra.mxu0 %v198
    %255 = vmatpush.bf16.msra.mxu0 %v196
    %256 = vmatpush.bf16.msra.mxu0 %v194
    %257 = vmatpush.bf16.msra.mxu0 %v192
    %258 = vmatpush.bf16.msra.mxu0 %v190
    %259 = vmatpush.bf16.msra.mxu0 %v188
    %260 = vmatmul.bf16.gmra.mxu0 %v88
    %v261 = vpop.f32.mrf.mxu0
    %v262 = vadd.f32 %v78, %v261
    %v263 = vpop.f32.mrf.mxu0
    %v264 = vadd.f32 %v78, %v263
    %265 = vdwg.mxu0
    %266 = vmatpush.bf16.msra.mxu0 %v218
    %267 = vmatpush.bf16.msra.mxu0 %v216
    %268 = vmatpush.bf16.msra.mxu0 %v214
    %269 = vmatpush.bf16.msra.mxu0 %v212
    %270 = vmatpush.bf16.msra.mxu0 %v210
    %271 = vmatpush.bf16.msra.mxu0 %v208
    %272 = vmatpush.bf16.msra.mxu0 %v206
    %273 = vmatpush.bf16.msra.mxu0 %v204
    %274 = vmatmul.bf16.gmra.mxu0 %v89
    %v275 = vpop.f32.mrf.mxu0
    %v276 = vadd.f32 %v262, %v275
    %v277 = vpop.f32.mrf.mxu0
    %v278 = vadd.f32 %v264, %v277
    %279 = vdwg.mxu0
    %280 = vmatpush.bf16.msra.mxu0 %v203
    %281 = vmatpush.bf16.msra.mxu0 %v201
    %282 = vmatpush.bf16.msra.mxu0 %v199
    %283 = vmatpush.bf16.msra.mxu0 %v197
    %284 = vmatpush.bf16.msra.mxu0 %v195
    %285 = vmatpush.bf16.msra.mxu0 %v193
    %286 = vmatpush.bf16.msra.mxu0 %v191
    %287 = vmatpush.bf16.msra.mxu0 %v189
    %288 = vmatmul.bf16.gmra.mxu0 %v88
    %v289 = vpop.f32.mrf.mxu0
    %v290 = vadd.f32 %v79, %v289
    %v291 = vpop.f32.mrf.mxu0
    %v292 = vadd.f32 %v79, %v291
    %293 = vdwg.mxu0
    %294 = vmatpush.bf16.msra.mxu0 %v219
    %295 = vmatpush.bf16.msra.mxu0 %v217
    %296 = vmatpush.bf16.msra.mxu0 %v215
    %297 = vmatpush.bf16.msra.mxu0 %v213
    %298 = vmatpush.bf16.msra.mxu0 %v211
    %299 = vmatpush.bf16.msra.mxu0 %v209
    %300 = vmatpush.bf16.msra.mxu0 %v207
    %301 = vmatpush.bf16.msra.mxu0 %v205
    %302 = vmatmul.bf16.gmra.mxu0 %v89
    %v303 = vpop.f32.mrf.mxu0
    %v304 = vadd.f32 %v290, %v303
    %v305 = vpop.f32.mrf.mxu0
    %v306 = vadd.f32 %v292, %v305
    %307 = vdwg.mxu0
    %v308 = vmax.f32 %v276, 0.0
    %v309 = vmax.f32 %v304, 0.0
    %v310 = vmax.f32 %v278, 0.0
    %v311 = vmax.f32 %v306, 0.0
    %v312 = vpack.c.bf16 %v310, %v308
    %v313 = vpack.c.bf16 %v311, %v309
    %v314 = vld [vmem:[%s3] sm:$0xf]
    %v315 = vld [vmem:[%s3 + $0x4] sm:$0xf]
    %v316 = vld [vmem:[%s3 + $0x8] sm:$0xf]
    %v317 = vld [vmem:[%s3 + $0xc] sm:$0xf]
    %v318 = vld [vmem:[%s3 + $0x10] sm:$0xf]
    %v319 = vld [vmem:[%s3 + $0x14] sm:$0xf]
    %v320 = vld [vmem:[%s3 + $0x18] sm:$0xf]
    %v321 = vld [vmem:[%s3 + $0x1c] sm:$0xf]
    %v322 = vld [vmem:[%s3 + $0x20] sm:$0xf]
    %v323 = vld [vmem:[%s3 + $0x24] sm:$0xf]
    %v324 = vld [vmem:[%s3 + $0x28] sm:$0xf]
    %v325 = vld [vmem:[%s3 + $0x2c] sm:$0xf]
    %v326 = vld [vmem:[%s3 + $0x30] sm:$0xf]
    %v327 = vld [vmem:[%s3 + $0x34] sm:$0xf]
    %v328 = vld [vmem:[%s3 + $0x38] sm:$0xf]
    %v329 = vld [vmem:[%s3 + $0x3c] sm:$0xf]
    %v330 = vld [vmem:[%s3 + $0x40] sm:$0xf]
    %v331 = vld [vmem:[%s3 + $0x44] sm:$0xf]
    %v332 = vld [vmem:[%s3 + $0x48] sm:$0xf]
    %v333 = vld [vmem:[%s3 + $0x4c] sm:$0xf]
    %v334 = vld [vmem:[%s3 + $0x50] sm:$0xf]
    %v335 = vld [vmem:[%s3 + $0x54] sm:$0xf]
    %v336 = vld [vmem:[%s3 + $0x58] sm:$0xf]
    %v337 = vld [vmem:[%s3 + $0x5c] sm:$0xf]
    %v338 = vld [vmem:[%s3 + $0x60] sm:$0xf]
    %v339 = vld [vmem:[%s3 + $0x64] sm:$0xf]
    %v340 = vld [vmem:[%s3 + $0x68] sm:$0xf]
    %v341 = vld [vmem:[%s3 + $0x6c] sm:$0xf]
    %v342 = vld [vmem:[%s3 + $0x70] sm:$0xf]
    %v343 = vld [vmem:[%s3 + $0x74] sm:$0xf]
    %v344 = vld [vmem:[%s3 + $0x78] sm:$0xf]
    %v345 = vld [vmem:[%s3 + $0x7c] sm:$0xf]
    %v346 = vld [vmem:[%s4] sm:$0x1]
    %v348 = vperm.slane %v346, 0
    %v382 = vunpack.c.l.b16 %v314
    %v383 = vunpack.c.l.b16 %v315
    %v384 = vunpack.c.l.b16 %v316
    %v385 = vunpack.c.l.b16 %v317
    %v386 = vunpack.c.l.b16 %v318
    %v387 = vunpack.c.l.b16 %v319
    %v388 = vunpack.c.l.b16 %v320
    %v389 = vunpack.c.l.b16 %v321
    %v390 = vunpack.c.l.b16 %v322
    %v391 = vunpack.c.l.b16 %v323
    %v392 = vunpack.c.l.b16 %v324
    %v393 = vunpack.c.l.b16 %v325
    %v394 = vunpack.c.l.b16 %v326
    %v395 = vunpack.c.l.b16 %v327
    %v396 = vunpack.c.l.b16 %v328
    %v397 = vunpack.c.l.b16 %v329
    %v398 = vunpack.c.l.b16 %v330
    %v399 = vunpack.c.l.b16 %v331
    %v400 = vunpack.c.l.b16 %v332
    %v401 = vunpack.c.l.b16 %v333
    %v402 = vunpack.c.l.b16 %v334
    %v403 = vunpack.c.l.b16 %v335
    %v404 = vunpack.c.l.b16 %v336
    %v405 = vunpack.c.l.b16 %v337
    %v406 = vunpack.c.l.b16 %v338
    %v407 = vunpack.c.l.b16 %v339
    %v408 = vunpack.c.l.b16 %v340
    %v409 = vunpack.c.l.b16 %v341
    %v410 = vunpack.c.l.b16 %v342
    %v411 = vunpack.c.l.b16 %v343
    %v412 = vunpack.c.l.b16 %v344
    %v413 = vunpack.c.l.b16 %v345
    %v414 = vpack.c.b16 %v383, %v382
    %v415 = vpack.c.b16 %v385, %v384
    %v416 = vpack.c.b16 %v387, %v386
    %v417 = vpack.c.b16 %v389, %v388
    %v418 = vpack.c.b16 %v391, %v390
    %v419 = vpack.c.b16 %v393, %v392
    %v420 = vpack.c.b16 %v395, %v394
    %v421 = vpack.c.b16 %v397, %v396
    %v422 = vpack.c.b16 %v399, %v398
    %v423 = vpack.c.b16 %v401, %v400
    %v424 = vpack.c.b16 %v403, %v402
    %v425 = vpack.c.b16 %v405, %v404
    %v426 = vpack.c.b16 %v407, %v406
    %v427 = vpack.c.b16 %v409, %v408
    %v428 = vpack.c.b16 %v411, %v410
    %v429 = vpack.c.b16 %v413, %v412
    %446 = vmatpush.bf16.msra.mxu0 %v421
    %447 = vmatpush.bf16.msra.mxu0 %v420
    %448 = vmatpush.bf16.msra.mxu0 %v419
    %449 = vmatpush.bf16.msra.mxu0 %v418
    %450 = vmatpush.bf16.msra.mxu0 %v417
    %451 = vmatpush.bf16.msra.mxu0 %v416
    %452 = vmatpush.bf16.msra.mxu0 %v415
    %453 = vmatpush.bf16.msra.mxu0 %v414
    %454 = vmatmul.bf16.gmra.mxu0 %v312
    %v455 = vpop.f32.mrf.mxu0
    %v456 = vadd.f32 %v348, %v455
    %v457 = vpop.f32.mrf.mxu0
    %v458 = vadd.f32 %v348, %v457
    %459 = vdwg.mxu0
    %460 = vmatpush.bf16.msra.mxu0 %v429
    %461 = vmatpush.bf16.msra.mxu0 %v428
    %462 = vmatpush.bf16.msra.mxu0 %v427
    %463 = vmatpush.bf16.msra.mxu0 %v426
    %464 = vmatpush.bf16.msra.mxu0 %v425
    %465 = vmatpush.bf16.msra.mxu0 %v424
    %466 = vmatpush.bf16.msra.mxu0 %v423
    %467 = vmatpush.bf16.msra.mxu0 %v422
    %468 = vmatmul.bf16.gmra.mxu0 %v313
    %v469 = vpop.f32.mrf.mxu0
    %v470 = vadd.f32 %v456, %v469
    %v471 = vpop.f32.mrf.mxu0
    %v472 = vadd.f32 %v458, %v471
    %473 = vdwg.mxu0
    %v474 = vmax.f32 %v470, 0.0
    %v475 = vmax.f32 %v472, 0.0
    %v476 = vpack.c.bf16 %v475, %v474
    %v477 = vld [vmem:[%s5] sm:$0xf]
    %v478 = vld [vmem:[%s5 + $0x4] sm:$0xf]
    %v479 = vld [vmem:[%s5 + $0x8] sm:$0xf]
    %v480 = vld [vmem:[%s5 + $0xc] sm:$0xf]
    %v481 = vld [vmem:[%s5 + $0x10] sm:$0xf]
    %v482 = vld [vmem:[%s5 + $0x14] sm:$0xf]
    %v483 = vld [vmem:[%s5 + $0x18] sm:$0xf]
    %v484 = vld [vmem:[%s5 + $0x1c] sm:$0xf]
    %v485 = vld [vmem:[%s5 + $0x20] sm:$0xf]
    %v486 = vld [vmem:[%s5 + $0x24] sm:$0xf]
    %v487 = vld [vmem:[%s5 + $0x28] sm:$0xf]
    %v488 = vld [vmem:[%s5 + $0x2c] sm:$0xf]
    %v489 = vld [vmem:[%s5 + $0x30] sm:$0xf]
    %v490 = vld [vmem:[%s5 + $0x34] sm:$0xf]
    %v491 = vld [vmem:[%s5 + $0x38] sm:$0xf]
    %v492 = vld [vmem:[%s5 + $0x3c] sm:$0xf]
    %v493 = vld [vmem:[%s6] sm:$0x1]
    %v495 = vperm.slane %v493, 0
    %v513 = vunpack.c.l.b16 %v477
    %v514 = vunpack.c.l.b16 %v478
    %v515 = vunpack.c.l.b16 %v479
    %v516 = vunpack.c.l.b16 %v480
    %v517 = vunpack.c.l.b16 %v481
    %v518 = vunpack.c.l.b16 %v482
    %v519 = vunpack.c.l.b16 %v483
    %v520 = vunpack.c.l.b16 %v484
    %v521 = vunpack.c.l.b16 %v485
    %v522 = vunpack.c.l.b16 %v486
    %v523 = vunpack.c.l.b16 %v487
    %v524 = vunpack.c.l.b16 %v488
    %v525 = vunpack.c.l.b16 %v489
    %v526 = vunpack.c.l.b16 %v490
    %v527 = vunpack.c.l.b16 %v491
    %v528 = vunpack.c.l.b16 %v492
    %v529 = vpack.c.b16 %v514, %v513
    %v530 = vpack.c.b16 %v516, %v515
    %v531 = vpack.c.b16 %v518, %v517
    %v532 = vpack.c.b16 %v520, %v519
    %v533 = vpack.c.b16 %v522, %v521
    %v534 = vpack.c.b16 %v524, %v523
    %v535 = vpack.c.b16 %v526, %v525
    %v536 = vpack.c.b16 %v528, %v527
    %545 = vmatpush.bf16.msra.mxu0 %v536
    %546 = vmatpush.bf16.msra.mxu0 %v535
    %547 = vmatpush.bf16.msra.mxu0 %v534
    %548 = vmatpush.bf16.msra.mxu0 %v533
    %549 = vmatpush.bf16.msra.mxu0 %v532
    %550 = vmatpush.bf16.msra.mxu0 %v531
    %551 = vmatpush.bf16.msra.mxu0 %v530
    %552 = vmatpush.bf16.msra.mxu0 %v529
    %553 = vmatmul.bf16.gmra.mxu0 %v476
    %v554 = vpop.f32.mrf.mxu0
    %v555 = vadd.f32 %v495, %v554
    %v556 = vpop.f32.mrf.mxu0
    %v557 = vadd.f32 %v495, %v556
    %558 = vdwg.mxu0
    %559 = vst [vmem:[#allocation3] sm:$0xff] %v555
    %560 = vst [vmem:[#allocation3 + $0x8] sm:$0xff] %v557
    // Predicated region
    $region30: #{mlp_gene_forward.1} parent=1 // pred_check
      _
    $region31: #{mlp_gene_forward.1} parent=1 // pred_check_branch
      %562 = sbr.rel (0) target = $region33
    $region32: #{mlp_gene_forward.1} parent=1 // pred_region
      %564 = vsyncadd [#allocation4], 0
      %s565 = sshll.u32 [#allocation3], 4
      %s566 = int_to_ptr.vmem [resolvable:$true] %s565
      %s567 = sshll.u32 %s7, 4
      %s568 = int_to_ptr.hbm [resolvable:$true] %s567
      %573 = dma.vmem_to_hbm [thread:$0]  %s566, 256, %s568, [#allocation4], 128, 128, 8
    $region33: #{mlp_gene_forward.1} parent=1 // pred_fallthru
      _
    // Predicated region
    $region34: #{mlp_gene_forward.1} parent=1 // pred_check
      _
    $region35: #{mlp_gene_forward.1} parent=1 // pred_check_branch
      %575 = sbr.rel (0) target = $region37
    $region36: #{mlp_gene_forward.1} parent=1 // pred_region
      %577 = dma.done [#allocation4], 256
    $region37: #{mlp_gene_forward.1} parent=1 // pred_fallthru
      _
    %578 = vsyncpa [#allocation4], 1

</llo_original>
